<compile_context>
chip_gen: v5e
topology: v5e:2x2
jax: 0.10.0
libtpu: 0.0.40
codegen_flags: <defaults>
</compile_context>

<pallas_src>
import functools
import math

import jax
import jax.numpy as jnp
from jax import lax
from jax.experimental import pallas as pl
from jax.experimental.pallas import tpu as pltpu


def _round_up(x: int, m: int) -> int:
    return (x + m - 1) // m * m


def _gated_attention_kernel(h_ref, wvu_ref, bvu_ref, wwt_ref, bw_ref,   # inputs
                            a_ref, m_ref,                               # outputs
                            m_sc, l_sc, macc_sc, logits_sc,             # scratch
                            *, n_valid, d_pad):
    p = pl.program_id(0)          # pass: 0 = stream H / stats / M, 1 = write A
    i = pl.program_id(1)          # tile index along the instance axis
    n_tiles = pl.num_programs(1)
    tile_n = h_ref.shape[0]

    @pl.when((p == 0) & (i == 0))
    def _init():
        m_sc[...] = jnp.full(m_sc.shape, -jnp.inf, m_sc.dtype)
        l_sc[...] = jnp.zeros(l_sc.shape, l_sc.dtype)
        macc_sc[...] = jnp.zeros(macc_sc.shape, macc_sc.dtype)

    @pl.when(p == 0)
    def _pass0():
        h = h_ref[...]                                              # (tile_n, Lp) bf16
        # Fused V|U projection: one MXU matmul, f32 accumulation.
        g = jnp.dot(h, wvu_ref[...],
                    preferred_element_type=jnp.float32) + bvu_ref[...]   # (tile_n, 2*Dp)
        gated = jnp.tanh(g[:, :d_pad]) * jax.nn.sigmoid(g[:, d_pad:])    # (tile_n, Dp)

        # Attention logits directly in lane-dense (K, tile_n) layout:
        # wwT (K, Dp) contracted with gated (tile_n, Dp) over the minor dims.
        logits = lax.dot_general(
            wwt_ref[...], gated,
            dimension_numbers=(((1,), (1,)), ((), ())),
            preferred_element_type=jnp.float32) + bw_ref[...]            # (K, tile_n)

        # Mask zero-padded instances so they drop out of the softmax.
        col = jax.lax.broadcasted_iota(jnp.int32, logits.shape, 1) + i * tile_n
        logits = jnp.where(col < n_valid, logits, -jnp.inf)
        logits_sc[i] = logits

        # Online softmax over N (global) + flash-style M accumulation on the MXU.
        m_old = m_sc[...]
        m_new = jnp.maximum(m_old, jnp.max(logits, axis=1, keepdims=True))
        alpha = jnp.exp(m_old - m_new)
        pexp = jnp.exp(logits - m_new)                                   # (K, tile_n)
        l_sc[...] = alpha * l_sc[...] + jnp.sum(pexp, axis=1, keepdims=True)
        macc_sc[...] = alpha * macc_sc[...] + jnp.dot(
            pexp, h.astype(jnp.float32), preferred_element_type=jnp.float32)
        m_sc[...] = m_new

    @pl.when(p == 1)
    def _pass1():
        inv_l = pl.reciprocal(l_sc[...], approx=False)                   # (K, 1)
        a_ref[...] = (jnp.exp(logits_sc[i] - m_sc[...]) * inv_l).astype(a_ref.dtype)

    @pl.when((p == 1) & (i == n_tiles - 1))
    def _finalize():
        inv_l = pl.reciprocal(l_sc[...], approx=False)
        m_ref[...] = (macc_sc[...] * inv_l).astype(m_ref.dtype)


def _choose_tile_n(n: int, l_pad: int, itemsize: int) -> int:
    # Keep the double-buffered H tile under ~16 MiB -> safe on v5e/v6e/v7x VMEM.
    budget = 16 * 1024 * 1024
    tile_n = 1024
    while tile_n > 128 and 2 * tile_n * l_pad * itemsize > budget:
        tile_n //= 2
    return max(128, min(tile_n, _round_up(n, 128)))


def gated_attention_forward(features, params, *, compute_dtype=jnp.bfloat16,
                            tile_n=None):
    """Pallas-backed GatedAttentionLayer forward. Returns (A (K,N), M (K,L))."""
    wv, bv, wu, bu, ww, bw = (params[k] for k in ("wv", "bv", "wu", "bu", "ww", "bw"))
    L, D = wv.shape
    K = ww.shape[1]

    H = features.reshape(-1, L).astype(jnp.float32)        # H = features.view(-1, L)
    N = H.shape[0]

    Lp = _round_up(L, 128)
    Dp = _round_up(D, 128)
    itemsize = jnp.dtype(compute_dtype).itemsize
    if tile_n is None:
        tile_n = _choose_tile_n(N, Lp, itemsize)
    else:
        tile_n = max(128, min(_round_up(tile_n, 128), _round_up(N, 128)))
    n_pad = _round_up(N, tile_n)
    n_tiles = n_pad // tile_n

    # Zero-pad H to (n_pad, Lp); fuse + pad weights. MXU operands in bf16,
    # biases and the tiny second-stage weight stay f32.
    if (n_pad, Lp) != (N, L):
        H = jnp.pad(H, ((0, n_pad - N), (0, Lp - L)))
    H = H.astype(compute_dtype)
    wvu = (jnp.zeros((Lp, 2 * Dp), jnp.float32)
           .at[:L, :D].set(wv).at[:L, Dp:Dp + D].set(wu)).astype(compute_dtype)
    bvu = jnp.zeros((1, 2 * Dp), jnp.float32).at[0, :D].set(bv).at[0, Dp:Dp + D].set(bu)
    wwt = jnp.zeros((K, Dp), jnp.float32).at[:, :D].set(ww.T)
    bw2 = bw.reshape(K, 1).astype(jnp.float32)

    kernel = functools.partial(_gated_attention_kernel, n_valid=N, d_pad=Dp)

    h_index = lambda p, i: (i * (1 - p) + (n_tiles - 1) * p, 0)  # stream H only in pass 0

    flops = 2 * n_pad * Lp * 2 * Dp + 2 * n_pad * Dp * K + 2 * n_pad * K * Lp
    transcendentals = n_pad * (2 * Dp + 2 * K)
    bytes_accessed = (n_pad * Lp * itemsize + Lp * 2 * Dp * itemsize
                      + (2 * Dp + K * Dp + K) * 4 + K * (n_pad + Lp) * 4)

    vmem_limit = int(min(max(
        2 * tile_n * Lp * itemsize          # double-buffered H tile
        + 2 * Lp * 2 * Dp * itemsize        # fused V|U weight
        + n_tiles * 8 * tile_n * 4          # logits scratch (K padded to 8 sublanes)
        + 4 * tile_n * 2 * Dp * 4           # transients (g, f32 casts), generous
        + 8 * Lp * 4 * 4                    # M accumulator + M output block
        + 8 * tile_n * 4 * 2                # A output block (double-buffered)
        + (8 << 20),                        # slack
        16 << 20), 48 << 20))

    a_full, m_full = pl.pallas_call(
        kernel,
        out_shape=(jax.ShapeDtypeStruct((K, n_pad), jnp.float32),
                   jax.ShapeDtypeStruct((K, Lp), jnp.float32)),
        grid_spec=pltpu.PrefetchScalarGridSpec(
            num_scalar_prefetch=0,
            grid=(2, n_tiles),
            in_specs=[
                pl.BlockSpec((tile_n, Lp), h_index),               # H tiles
                pl.BlockSpec((Lp, 2 * Dp), lambda p, i: (0, 0)),   # fused V|U weight
                pl.BlockSpec((1, 2 * Dp), lambda p, i: (0, 0)),    # fused V|U bias
                pl.BlockSpec((K, Dp), lambda p, i: (0, 0)),        # attention weight^T
                pl.BlockSpec((K, 1), lambda p, i: (0, 0)),         # attention bias
            ],
            out_specs=(
                pl.BlockSpec((K, tile_n), lambda p, i: (0, i * p)),  # A: written in pass 1
                pl.BlockSpec((K, Lp), lambda p, i: (0, 0)),          # M: resident accumulator
            ),
            scratch_shapes=[
                pltpu.VMEM((K, 1), jnp.float32),                   # running max
                pltpu.VMEM((K, 1), jnp.float32),                   # running sum(exp)
                pltpu.VMEM((K, Lp), jnp.float32),                  # un-normalized M
                pltpu.VMEM((n_tiles, K, tile_n), jnp.float32),     # per-tile logits
            ]),
        compiler_params=pltpu.CompilerParams(
            dimension_semantics=("arbitrary", "arbitrary"),
            vmem_limit_bytes=vmem_limit),
        cost_estimate=pl.CostEstimate(flops=int(flops),
                                      transcendentals=int(transcendentals),
                                      bytes_accessed=int(bytes_accessed)),
    )(H, wvu, bvu, wwt, bw2)

    return a_full[:, :N], m_full[:, :L]


def init_params(key, input_dims, hidden_dims, attention_dims):
    """Deterministic PyTorch-nn.Linear-style init (U[-1/sqrt(fan_in), 1/sqrt(fan_in)])."""
    ks = jax.random.split(key, 6)

    def linear(kw, kb, fan_in, fan_out):
        bound = 1.0 / math.sqrt(fan_in)
        w = jax.random.uniform(kw, (fan_in, fan_out), jnp.float32, -bound, bound)
        b = jax.random.uniform(kb, (fan_out,), jnp.float32, -bound, bound)
        return w, b

    wv, bv = linear(ks[0], ks[1], input_dims, hidden_dims)
    wu, bu = linear(ks[2], ks[3], input_dims, hidden_dims)
    ww, bw = linear(ks[4], ks[5], hidden_dims, attention_dims)
    return dict(wv=wv, bv=bv, wu=wu, bu=bu, ww=ww, bw=bw)


def _pure_ref(features, params, cast_dtype=None):
    """Pure-JAX reference (same math as the PyTorch module); optional bf16-cast
    of the MXU operands to match the kernel's compute dtype bit-for-bit."""
    L = params["wv"].shape[0]
    H = features.reshape(-1, L).astype(jnp.float32)
    wv, wu = params["wv"], params["wu"]
    if cast_dtype is not None:
        H = H.astype(cast_dtype).astype(jnp.float32)
        wv = wv.astype(cast_dtype).astype(jnp.float32)
        wu = wu.astype(cast_dtype).astype(jnp.float32)
    av = jnp.tanh(H @ wv + params["bv"])
    au = jax.nn.sigmoid(H @ wu + params["bu"])
    logits = (av * au) @ params["ww"] + params["bw"]
    A = jax.nn.softmax(logits.T, axis=1)
    M = A @ H
    return A, M


def _check(features, params, A, M):
    L = params["wv"].shape[0]
    K = params["ww"].shape[1]
    N = features.reshape(-1, L).shape[0]
    assert A.shape == (K, N)
    assert M.shape == (K, L)
    # Tight: against a reference using the same bf16 MXU operands.
    A_t, M_t = _pure_ref(features, params, cast_dtype=jnp.bfloat16)
    assert jnp.allclose(A, A_t, atol=1e-4, rtol=1e-4)
    assert jnp.allclose(M, M_t, atol=1e-4, rtol=1e-4)
    # Loose: against the full-f32 PyTorch-equivalent reference (bf16 tolerance).
    A_f, M_f = _pure_ref(features, params)
    assert jnp.allclose(A, A_f, atol=3e-2, rtol=3e-2)
    assert jnp.allclose(M, M_f, atol=3e-2, rtol=3e-2)


if __name__ == "__main__":
    key = jax.random.PRNGKey(0)
    k1, k2, k3, k4 = jax.random.split(key, 4)

    # Test 1: module default sizes; features (2, 4, 16) -> N = 8 instances.
    input_dims, hidden_dims, attention_dims = 16, 32, 1
    features = jax.random.normal(k1, (2, 4, input_dims), dtype=jnp.float32)
    params = init_params(k2, input_dims, hidden_dims, attention_dims)
    A, M = gated_attention_forward(features, params)
    jax.block_until_ready((A, M))
    _check(features, params, A, M)

    # Test 2: multi-tile path (online softmax across N tiles) with K = 2;
    # features (4, 75, 16) -> N = 300 instances, tile_n = 128 -> 3 tiles.
    features2 = jax.random.normal(k3, (4, 75, input_dims), dtype=jnp.float32)
    params2 = init_params(k4, input_dims, hidden_dims, 2)
    A2, M2 = gated_attention_forward(features2, params2, tile_n=128)
    jax.block_until_ready((A2, M2))
    _check(features2, params2, A2, M2)

    print("KERNEL_OK")
</pallas_src>

<mosaic_0001>
module attributes {stable_mosaic.version = 11 : i64} {
  func.func @_gated_attention_kernel(%arg0: i32, %arg1: i32, %arg2: memref<128x128xbf16, #tpu.memory_space<vmem>>, %arg3: memref<128x256xbf16, #tpu.memory_space<vmem>>, %arg4: memref<1x256xf32, #tpu.memory_space<vmem>>, %arg5: memref<1x128xf32, #tpu.memory_space<vmem>>, %arg6: memref<1x1xf32, #tpu.memory_space<vmem>>, %arg7: memref<1x128xf32, #tpu.memory_space<vmem>>, %arg8: memref<1x128xf32, #tpu.memory_space<vmem>>, %arg9: memref<1x1xf32, #tpu.memory_space<vmem>>, %arg10: memref<1x1xf32, #tpu.memory_space<vmem>>, %arg11: memref<1x128xf32, #tpu.memory_space<vmem>>, %arg12: memref<1x1x128xf32, #tpu.memory_space<vmem>>) attributes {dimension_semantics = [#tpu.dimension_semantics<arbitrary>, #tpu.dimension_semantics<arbitrary>], iteration_bounds = array<i64: 2, 1>, scalar_prefetch = 0 : i64, scratch_operands = 4 : i64, tpu.core_type = #tpu.core_type<tc>, window_params = [{transform_indices = @transform_0, window_bounds = array<i64: 128, 128>}, {pipeline_mode = #tpu.pipeline_mode<synchronous>, transform_indices = @transform_1, window_bounds = array<i64: 128, 256>}, {pipeline_mode = #tpu.pipeline_mode<synchronous>, transform_indices = @transform_2, window_bounds = array<i64: 1, 256>}, {pipeline_mode = #tpu.pipeline_mode<synchronous>, transform_indices = @transform_3, window_bounds = array<i64: 1, 128>}, {pipeline_mode = #tpu.pipeline_mode<synchronous>, transform_indices = @transform_4, window_bounds = array<i64: 1, 1>}, {transform_indices = @transform_5, window_bounds = array<i64: 1, 128>}, {pipeline_mode = #tpu.pipeline_mode<synchronous>, transform_indices = @transform_6, window_bounds = array<i64: 1, 128>}]} {
    %c0_i32 = arith.constant 0 : i32
    %0 = arith.cmpi eq, %arg0, %c0_i32 : i32
    %c0_i32_0 = arith.constant 0 : i32
    %1 = arith.cmpi eq, %arg1, %c0_i32_0 : i32
    %2 = arith.andi %0, %1 : i1
    %3 = arith.extui %2 : i1 to i32
    %c0_i32_1 = arith.constant 0 : i32
    %4 = arith.cmpi ne, %3, %c0_i32_1 : i32
    scf.if %4 {
      %cst = arith.constant 0xFF800000 : f32
      %16 = vector.broadcast %cst : f32 to vector<1x1xf32>
      %c0 = arith.constant 0 : index
      %c0_8 = arith.constant 0 : index
      %17 = vector.load %arg9[%c0, %c0_8] : memref<1x1xf32, #tpu.memory_space<vmem>>, vector<1x1xf32>
      tpu.vector_store %arg9[%c0, %c0_8], %16 {strides = array<i32>} : memref<1x1xf32, #tpu.memory_space<vmem>>, vector<1x1xf32>,
      %cst_9 = arith.constant 0.000000e+00 : f32
      %18 = vector.broadcast %cst_9 : f32 to vector<1x1xf32>
      %c0_10 = arith.constant 0 : index
      %c0_11 = arith.constant 0 : index
      %19 = vector.load %arg10[%c0_10, %c0_11] : memref<1x1xf32, #tpu.memory_space<vmem>>, vector<1x1xf32>
      tpu.vector_store %arg10[%c0_10, %c0_11], %18 {strides = array<i32>} : memref<1x1xf32, #tpu.memory_space<vmem>>, vector<1x1xf32>,
      %cst_12 = arith.constant 0.000000e+00 : f32
      %20 = vector.broadcast %cst_12 : f32 to vector<1x128xf32>
      %c0_13 = arith.constant 0 : index
      %c0_14 = arith.constant 0 : index
      %21 = vector.load %arg11[%c0_13, %c0_14] : memref<1x128xf32, #tpu.memory_space<vmem>>, vector<1x128xf32>
      tpu.vector_store %arg11[%c0_13, %c0_14], %20 {strides = array<i32>} : memref<1x128xf32, #tpu.memory_space<vmem>>, vector<1x128xf32>,
    } else {
    }
    %c0_i32_2 = arith.constant 0 : i32
    %5 = arith.cmpi eq, %arg0, %c0_i32_2 : i32
    %6 = arith.extui %5 : i1 to i32
    %c0_i32_3 = arith.constant 0 : i32
    %7 = arith.cmpi ne, %6, %c0_i32_3 : i32
    scf.if %7 {
      %c0 = arith.constant 0 : index
      %c0_8 = arith.constant 0 : index
      %16 = vector.load %arg2[%c0, %c0_8] : memref<128x128xbf16, #tpu.memory_space<vmem>>, vector<128x128xbf16>
      %c0_9 = arith.constant 0 : index
      %c0_10 = arith.constant 0 : index
      %17 = vector.load %arg3[%c0_9, %c0_10] : memref<128x256xbf16, #tpu.memory_space<vmem>>, vector<128x256xbf16>
      %cst = arith.constant dense<0.000000e+00> : vector<128x256xf32>
      %18 = tpu.matmul %16, %17, %cst {dimension_numbers = #tpu.dot_dimension_numbers<[1], [0], [0], [1], [0, 0, 1, 1], [], []>} : vector<128x128xbf16>, vector<128x256xbf16>, vector<128x256xf32> -> vector<128x256xf32>
      %c0_11 = arith.constant 0 : index
      %c0_12 = arith.constant 0 : index
      %19 = vector.load %arg4[%c0_11, %c0_12] : memref<1x256xf32, #tpu.memory_space<vmem>>, vector<1x256xf32>
      %20 = vector.broadcast %19 : vector<1x256xf32> to vector<128x256xf32>
      %21 = arith.addf %18, %20 : vector<128x256xf32>
      %22 = vector.extract_strided_slice %21 {offsets = [0, 0], sizes = [128, 128], strides = [1, 1]} : vector<128x256xf32> to vector<128x128xf32>
      %23 = math.tanh %22 : vector<128x128xf32>
      %24 = vector.extract_strided_slice %21 {offsets = [0, 128], sizes = [128, 128], strides = [1, 1]} : vector<128x256xf32> to vector<128x128xf32>
      %25 = arith.negf %24 : vector<128x128xf32>
      %26 = math.exp %25 : vector<128x128xf32>
      %cst_13 = arith.constant 1.000000e+00 : f32
      %27 = vector.broadcast %cst_13 : f32 to vector<128x128xf32>
      %28 = arith.addf %27, %26 : vector<128x128xf32>
      %29 = arith.divf %27, %28 : vector<128x128xf32>
      %30 = arith.mulf %23, %29 : vector<128x128xf32>
      %c0_14 = arith.constant 0 : index
      %c0_15 = arith.constant 0 : index
      %31 = vector.load %arg5[%c0_14, %c0_15] : memref<1x128xf32, #tpu.memory_space<vmem>>, vector<1x128xf32>
      %cst_16 = arith.constant dense<0.000000e+00> : vector<1x128xf32>
      %32 = tpu.matmul %31, %30, %cst_16 {dimension_numbers = #tpu.dot_dimension_numbers<[1], [1], [0], [0], [0, 0, 1, 0], [], []>} : vector<1x128xf32>, vector<128x128xf32>, vector<1x128xf32> -> vector<1x128xf32>
      %c0_17 = arith.constant 0 : index
      %c0_18 = arith.constant 0 : index
      %33 = vector.load %arg6[%c0_17, %c0_18] : memref<1x1xf32, #tpu.memory_space<vmem>>, vector<1x1xf32>
      %34 = vector.broadcast %33 : vector<1x1xf32> to vector<1x128xf32>
      %35 = arith.addf %32, %34 : vector<1x128xf32>
      %36 = tpu.iota {dimensions = array<i32: 1>} : vector<1x128xi32>
      %c128_i32 = arith.constant 128 : i32
      %37 = arith.muli %arg1, %c128_i32 : i32
      %38 = vector.broadcast %37 : i32 to vector<1x128xi32>
      %39 = arith.addi %36, %38 : vector<1x128xi32>
      %c8_i32 = arith.constant 8 : i32
      %40 = vector.broadcast %c8_i32 : i32 to vector<1x128xi32>
      %41 = arith.cmpi slt, %39, %40 : vector<1x128xi32>
      %cst_19 = arith.constant 0xFF800000 : f32
      %42 = vector.broadcast %cst_19 : f32 to vector<1x128xf32>
      %43 = arith.select %41, %35, %42 : vector<1x128xi1>, vector<1x128xf32>
      %44 = arith.index_cast %arg1 : i32 to index
      %c0_20 = arith.constant 0 : index
      %c0_21 = arith.constant 0 : index
      %45 = vector.load %arg12[%44, %c0_20, %c0_21] : memref<1x1x128xf32, #tpu.memory_space<vmem>>, vector<1x1x128xf32>
      %46 = vector.shape_cast %45 : vector<1x1x128xf32> to vector<1x128xf32>
      %47 = vector.shape_cast %43 : vector<1x128xf32> to vector<1x1x128xf32>
      tpu.vector_store %arg12[%44, %c0_20, %c0_21], %47 {strides = array<i32>} : memref<1x1x128xf32, #tpu.memory_space<vmem>>, vector<1x1x128xf32>,
      %c0_22 = arith.constant 0 : index
      %c0_23 = arith.constant 0 : index
      %48 = vector.load %arg9[%c0_22, %c0_23] : memref<1x1xf32, #tpu.memory_space<vmem>>, vector<1x1xf32>
      %cst_24 = arith.constant dense<0xFF800000> : vector<1xf32>
      %49 = vector.multi_reduction <maximumf>, %43, %cst_24 [1] : vector<1x128xf32> to vector<1xf32>
      %50 = vector.shape_cast %49 : vector<1xf32> to vector<1x1xf32>
      %51 = arith.maximumf %48, %50 : vector<1x1xf32>
      %52 = arith.subf %48, %51 : vector<1x1xf32>
      %53 = math.exp %52 : vector<1x1xf32>
      %54 = vector.broadcast %51 : vector<1x1xf32> to vector<1x128xf32>
      %55 = arith.subf %43, %54 : vector<1x128xf32>
      %56 = math.exp %55 : vector<1x128xf32>
      %c0_25 = arith.constant 0 : index
      %c0_26 = arith.constant 0 : index
      %57 = vector.load %arg10[%c0_25, %c0_26] : memref<1x1xf32, #tpu.memory_space<vmem>>, vector<1x1xf32>
      %58 = arith.mulf %53, %57 : vector<1x1xf32>
      %cst_27 = arith.constant dense<0.000000e+00> : vector<1xf32>
      %59 = vector.multi_reduction <add>, %56, %cst_27 [1] : vector<1x128xf32> to vector<1xf32>
      %60 = vector.shape_cast %59 : vector<1xf32> to vector<1x1xf32>
      %61 = arith.addf %58, %60 : vector<1x1xf32>
      %c0_28 = arith.constant 0 : index
      %c0_29 = arith.constant 0 : index
      %62 = vector.load %arg10[%c0_28, %c0_29] : memref<1x1xf32, #tpu.memory_space<vmem>>, vector<1x1xf32>
      tpu.vector_store %arg10[%c0_28, %c0_29], %61 {strides = array<i32>} : memref<1x1xf32, #tpu.memory_space<vmem>>, vector<1x1xf32>,
      %c0_30 = arith.constant 0 : index
      %c0_31 = arith.constant 0 : index
      %63 = vector.load %arg11[%c0_30, %c0_31] : memref<1x128xf32, #tpu.memory_space<vmem>>, vector<1x128xf32>
      %64 = vector.broadcast %53 : vector<1x1xf32> to vector<1x128xf32>
      %65 = arith.mulf %64, %63 : vector<1x128xf32>
      %66 = arith.extf %16 : vector<128x128xbf16> to vector<128x128xf32>
      %cst_32 = arith.constant dense<0.000000e+00> : vector<1x128xf32>
      %67 = tpu.matmul %56, %66, %cst_32 {dimension_numbers = #tpu.dot_dimension_numbers<[1], [0], [0], [1], [0, 0, 1, 1], [], []>} : vector<1x128xf32>, vector<128x128xf32>, vector<1x128xf32> -> vector<1x128xf32>
      %68 = arith.addf %65, %67 : vector<1x128xf32>
      %c0_33 = arith.constant 0 : index
      %c0_34 = arith.constant 0 : index
      %69 = vector.load %arg11[%c0_33, %c0_34] : memref<1x128xf32, #tpu.memory_space<vmem>>, vector<1x128xf32>
      tpu.vector_store %arg11[%c0_33, %c0_34], %68 {strides = array<i32>} : memref<1x128xf32, #tpu.memory_space<vmem>>, vector<1x128xf32>,
      %c0_35 = arith.constant 0 : index
      %c0_36 = arith.constant 0 : index
      %70 = vector.load %arg9[%c0_35, %c0_36] : memref<1x1xf32, #tpu.memory_space<vmem>>, vector<1x1xf32>
      tpu.vector_store %arg9[%c0_35, %c0_36], %51 {strides = array<i32>} : memref<1x1xf32, #tpu.memory_space<vmem>>, vector<1x1xf32>,
    } else {
    }
    %c1_i32 = arith.constant 1 : i32
    %8 = arith.cmpi eq, %arg0, %c1_i32 : i32
    %9 = arith.extui %8 : i1 to i32
    %c0_i32_4 = arith.constant 0 : i32
    %10 = arith.cmpi ne, %9, %c0_i32_4 : i32
    scf.if %10 {
      %c0 = arith.constant 0 : index
      %c0_8 = arith.constant 0 : index
      %16 = vector.load %arg10[%c0, %c0_8] : memref<1x1xf32, #tpu.memory_space<vmem>>, vector<1x1xf32>
      %17 = tpu.reciprocal %16 : vector<1x1xf32> -> vector<1x1xf32>
      %18 = arith.index_cast %arg1 : i32 to index
      %c0_9 = arith.constant 0 : index
      %c0_10 = arith.constant 0 : index
      %19 = vector.load %arg12[%18, %c0_9, %c0_10] : memref<1x1x128xf32, #tpu.memory_space<vmem>>, vector<1x1x128xf32>
      %20 = vector.shape_cast %19 : vector<1x1x128xf32> to vector<1x128xf32>
      %c0_11 = arith.constant 0 : index
      %c0_12 = arith.constant 0 : index
      %21 = vector.load %arg9[%c0_11, %c0_12] : memref<1x1xf32, #tpu.memory_space<vmem>>, vector<1x1xf32>
      %22 = vector.broadcast %21 : vector<1x1xf32> to vector<1x128xf32>
      %23 = arith.subf %20, %22 : vector<1x128xf32>
      %24 = math.exp %23 : vector<1x128xf32>
      %25 = vector.broadcast %17 : vector<1x1xf32> to vector<1x128xf32>
      %26 = arith.mulf %24, %25 : vector<1x128xf32>
      %c0_13 = arith.constant 0 : index
      %c0_14 = arith.constant 0 : index
      %27 = vector.load %arg7[%c0_13, %c0_14] : memref<1x128xf32, #tpu.memory_space<vmem>>, vector<1x128xf32>
      tpu.vector_store %arg7[%c0_13, %c0_14], %26 {strides = array<i32>} : memref<1x128xf32, #tpu.memory_space<vmem>>, vector<1x128xf32>,
    } else {
    }
    %c1_i32_5 = arith.constant 1 : i32
    %11 = arith.cmpi eq, %arg0, %c1_i32_5 : i32
    %c0_i32_6 = arith.constant 0 : i32
    %12 = arith.cmpi eq, %arg1, %c0_i32_6 : i32
    %13 = arith.andi %11, %12 : i1
    %14 = arith.extui %13 : i1 to i32
    %c0_i32_7 = arith.constant 0 : i32
    %15 = arith.cmpi ne, %14, %c0_i32_7 : i32
    scf.if %15 {
      %c0 = arith.constant 0 : index
      %c0_8 = arith.constant 0 : index
      %16 = vector.load %arg10[%c0, %c0_8] : memref<1x1xf32, #tpu.memory_space<vmem>>, vector<1x1xf32>
      %17 = tpu.reciprocal %16 : vector<1x1xf32> -> vector<1x1xf32>
      %c0_9 = arith.constant 0 : index
      %c0_10 = arith.constant 0 : index
      %18 = vector.load %arg11[%c0_9, %c0_10] : memref<1x128xf32, #tpu.memory_space<vmem>>, vector<1x128xf32>
      %19 = vector.broadcast %17 : vector<1x1xf32> to vector<1x128xf32>
      %20 = arith.mulf %18, %19 : vector<1x128xf32>
      %c0_11 = arith.constant 0 : index
      %c0_12 = arith.constant 0 : index
      %21 = vector.load %arg8[%c0_11, %c0_12] : memref<1x128xf32, #tpu.memory_space<vmem>>, vector<1x128xf32>
      tpu.vector_store %arg8[%c0_11, %c0_12], %20 {strides = array<i32>} : memref<1x128xf32, #tpu.memory_space<vmem>>, vector<1x128xf32>,
    } else {
    }
    return
  }
  func.func @transform_0(%arg0: i32, %arg1: i32) -> (i32, i32) {
    %c1_i32 = arith.constant 1 : i32
    %0 = arith.subi %c1_i32, %arg0 : i32
    %1 = arith.muli %arg1, %0 : i32
    %c0_i32 = arith.constant 0 : i32
    %2 = arith.muli %c0_i32, %arg0 : i32
    %3 = arith.addi %1, %2 : i32
    %c0_i32_0 = arith.constant 0 : i32
    %c0_i32_1 = arith.constant 0 : i32
    return %3, %c0_i32_0 : i32, i32
  }
  func.func @transform_1(%arg0: i32, %arg1: i32) -> (i32, i32) {
    %c0_i32 = arith.constant 0 : i32
    %c0_i32_0 = arith.constant 0 : i32
    %c0_i32_1 = arith.constant 0 : i32
    return %c0_i32, %c0_i32_0 : i32, i32
  }
  func.func @transform_2(%arg0: i32, %arg1: i32) -> (i32, i32) {
    %c0_i32 = arith.constant 0 : i32
    %c0_i32_0 = arith.constant 0 : i32
    %c0_i32_1 = arith.constant 0 : i32
    return %c0_i32, %c0_i32_0 : i32, i32
  }
  func.func @transform_3(%arg0: i32, %arg1: i32) -> (i32, i32) {
    %c0_i32 = arith.constant 0 : i32
    %c0_i32_0 = arith.constant 0 : i32
    %c0_i32_1 = arith.constant 0 : i32
    return %c0_i32, %c0_i32_0 : i32, i32
  }
  func.func @transform_4(%arg0: i32, %arg1: i32) -> (i32, i32) {
    %c0_i32 = arith.constant 0 : i32
    %c0_i32_0 = arith.constant 0 : i32
    %c0_i32_1 = arith.constant 0 : i32
    return %c0_i32, %c0_i32_0 : i32, i32
  }
  func.func @transform_5(%arg0: i32, %arg1: i32) -> (i32, i32) {
    %0 = arith.muli %arg1, %arg0 : i32
    %c0_i32 = arith.constant 0 : i32
    %c0_i32_0 = arith.constant 0 : i32
    return %c0_i32, %0 : i32, i32
  }
  func.func @transform_6(%arg0: i32, %arg1: i32) -> (i32, i32) {
    %c0_i32 = arith.constant 0 : i32
    %c0_i32_0 = arith.constant 0 : i32
    %c0_i32_1 = arith.constant 0 : i32
    return %c0_i32, %c0_i32_0 : i32, i32
  }
}

</mosaic_0001>

<llo_original>
// kernel: tpu_custom_call.1
$region0: #{tpu_custom_call.1}
  #allocation0 [shape = 'u32[]', space=smem, size = 0x4, offset = 0x4, fixed_abs, tag = 'smem constant byte address 0x4 - core index']
  #allocation1 [shape = 'u32[72,128]{1,0:T(1,128)}', space=vmem, size = 0x9000, scoped, tag = 'internal scratch']
  #allocation2 [shape = 'f32[1,1]{1,0:T(1,128)}', space=vmem, size = 0x200, scoped, tag = 'scratch operand']
  #allocation3 [shape = 'f32[1,1]{1,0:T(1,128)}', space=vmem, size = 0x200, scoped, tag = 'scratch operand']
  #allocation4 [shape = 'f32[1,128]{1,0:T(1,128)}', space=vmem, size = 0x200, scoped, tag = 'scratch operand']
  #allocation5 [shape = 'f32[1,1,128]{2,1,0:T(1,128)}', space=vmem, size = 0x200, scoped, tag = 'scratch operand']
  #allocation6 [shape = 'f32[1,1]{1,0:T(1,128)S(1)}', space=vmem, size = 0x200, scoped, tag = 'scoped memory for tpu_custom_call.1']
  %s0 = inlined_call_operand.hbm [shape: bf16[128,128], index: 0, kind: input, shape index: {}]
  %s1 = inlined_call_operand.hbm [shape: bf16[128,256], index: 1, kind: input, shape index: {}]
  %s2 = inlined_call_operand.vmem [shape: f32[1,256], index: 2, kind: input, shape index: {}]
  %s3 = inlined_call_operand.vmem [shape: f32[1,128], index: 3, kind: input, shape index: {}]
  %s4 = inlined_call_operand.<no memory space> [shape: f32[1,1], index: 4, kind: input, shape index: {}]
  %s5 = inlined_call_operand.hbm [shape: f32[1,128], index: 5, kind: output, shape index: {0}]
  %s6 = inlined_call_operand.hbm [shape: f32[1,128], index: 6, kind: output, shape index: {1}]
  %7 = xla_tuple %s5, %s6
  %s8 = sld [smem:[#allocation0]]
  $region85: #{tpu_custom_call.1} parent=0
    _
  %s10 = ssub.s32 1, %s8
  %s11 = scalar_select 0, %s10, %s8
  %v12 = vstv %s4
  %13 = vst [vmem:[#allocation6] sm:$0x1] %v12
  $region1: #{tpu_custom_call.1} parent=0
    #allocation7 [shape = 'u8[65536]{0}', space=vmem, size = 0x10000, scoped, tag = 'input window, operand 0']
    #allocation8 [shape = 's32[2]{0}', space=sflag, size = 0x8, scoped, tag = 'scoped memory for tpu_custom_call.1']
    #allocation9 [shape = 's32[2]{0}', space=sflag, size = 0x8, scoped, tag = 'scoped memory for tpu_custom_call.1']
    #allocation10 [shape = 'u8[65536]{0}', space=vmem, size = 0x10000, scoped, tag = 'input window, operand 1, single buffered']
    #allocation11 [shape = 's32[1]{0}', space=sflag, size = 0x4, scoped, tag = 'scoped memory for tpu_custom_call.1']
    #allocation12 [shape = 'u8[1024]{0}', space=vmem, size = 0x400, scoped, tag = 'output window, operand 0']
    #allocation13 [shape = 'u8[512]{0}', space=vmem, size = 0x400, scoped, tag = 'output window, operand 1, single buffered']
    #allocation14 [shape = 's32[1]{0}', space=sflag, size = 0x4, scoped, tag = 'scoped memory for tpu_custom_call.1']
    %14 = vsyncpa [#allocation8], 0
    %s15 = scalar_lea.sflag [#allocation8], 1
    %16 = vsyncpa %s15, 0
    %17 = vsyncpa [#allocation11], 0
    %18 = vsyncpa [#allocation9], 0
    %s19 = scalar_lea.sflag [#allocation9], 1
    %20 = vsyncpa %s19, 0
    %21 = vsyncpa [#allocation14], 0
    loop: start=0, step=1, limit=4
    $region2: #{tpu_custom_call.1} parent=1 // loop_pre_header
      _
    $region3: #{tpu_custom_call.1} parent=1 // loop_header
      %s23 = sphi 0, %s27
      %p24 = scmp.ge.s32.totalorder %s23, 4
      %s30 = sphi 0, %s42
      %s31 = sphi 0, %s38
      %s32 = sphi 0, %s30
      %s33 = sphi 0, %s31
      %s34 = sphi 0, %s32
      %s35 = sphi 0, %s33
      %s49 = sphi 0, %s51
      %s52 = sphi 0, %s49
      %s53 = sphi 0, %s52
      %s69 = sphi 0, %s53
      %s73 = sphi 0, %s73
      %s75 = sphi 0, %s73
      %s76 = sphi 0, %s75
      %s90 = sphi 0, %s76
      %s94 = sphi 0, %s94
      %s96 = sphi 0, %s94
      %s97 = sphi 0, %s96
      %s111 = sphi 0, %s97
      %s115 = sphi 0, %s115
      %s117 = sphi 0, %s115
      %s118 = sphi 0, %s117
      %s132 = sphi 0, %s118
      %s136 = sphi 0, %s136
      %s138 = sphi 0, %s136
      %s139 = sphi 0, %s138
      %s153 = sphi 0, %s139
      %s161 = sphi 0, %s163
      %s164 = sphi 0, %s161
      %s165 = sphi 0, %s164
      %s181 = sphi 0, %s165
      %s185 = sphi 0, %s185
      %s187 = sphi 0, %s185
      %s188 = sphi 0, %s187
      %s202 = sphi 0, %s188
    $region4: #{tpu_custom_call.1} parent=1 // loop_header_branch
      %26 = sbr.rel (%p24) target = $region8
    $region5: #{tpu_custom_call.1} parent=1 // loop_body
      %s28 = ssub.s32 %s23, 1
      %s29 = ssub.s32 %s23, 2
      %s36 = sadd.s32 1, %s31
      %p37 = scmp.ge.s32.totalorder %s36, 1
      %s38 = scalar_select %p37, 0, %s36
      %s39 = sadd.s32 1, %s30
      %s40 = scalar_select %p37, %s39, %s30
      %p41 = scmp.ge.s32.totalorder %s40, 2
      %s42 = scalar_select %p41, 0, %s40
      %s43 = ssub.s32 1, %s30
      %s44 = smul.u32 %s31, %s43
      %s45 = ssub.s32 1, %s42
      %s46 = smul.u32 %s38, %s45
      %s47 = ssub.s32 %s44, %s46
      %p48 = scmp.eq.s32.totalorder %s47, 0
      %s50 = sadd.s32 %s49, 1
      %s51 = scalar_select %p48, %s49, %s50
      %p54 = pneg %p48
      %p55 = scmp.eq.s32.totalorder %s23, 1
      %p56 = por %p54, %p55
      %p57 = scmp.ne.s32.totalorder %s49, %s52
      %p58 = scmp.eq.s32.totalorder %s23, 0
      %p59 = por %p57, %p58
      %p60 = scmp.ne.s32.totalorder %s49, %s52
      %p61 = scmp.eq.s32.totalorder %s28, 1
      %p62 = por %p60, %p61
      %p63 = scmp.ne.s32.totalorder %s52, %s53
      %p64 = scmp.eq.s32.totalorder %s28, 0
      %p65 = por %p63, %p64
      %p66 = scmp.ne.s32.totalorder %s52, %s53
      %p67 = scmp.eq.s32.totalorder %s29, 1
      %p68 = por %p66, %p67
      %p70 = scmp.ne.s32.totalorder %s53, %s69
      %p71 = scmp.eq.s32.totalorder %s29, 0
      %p72 = por %p70, %p71
      %s74 = sadd.s32 %s73, 1
      %p77 = scmp.eq.s32.totalorder %s23, 1
      %p78 = scmp.ne.s32.totalorder %s73, %s75
      %p79 = scmp.eq.s32.totalorder %s23, 0
      %p80 = por %p78, %p79
      %p81 = scmp.ne.s32.totalorder %s73, %s75
      %p82 = scmp.eq.s32.totalorder %s28, 1
      %p83 = por %p81, %p82
      %p84 = scmp.ne.s32.totalorder %s75, %s76
      %p85 = scmp.eq.s32.totalorder %s28, 0
      %p86 = por %p84, %p85
      %p87 = scmp.ne.s32.totalorder %s75, %s76
      %p88 = scmp.eq.s32.totalorder %s29, 1
      %p89 = por %p87, %p88
      %p91 = scmp.ne.s32.totalorder %s76, %s90
      %p92 = scmp.eq.s32.totalorder %s29, 0
      %p93 = por %p91, %p92
      %s95 = sadd.s32 %s94, 1
      %p98 = scmp.eq.s32.totalorder %s23, 1
      %p99 = scmp.ne.s32.totalorder %s94, %s96
      %p100 = scmp.eq.s32.totalorder %s23, 0
      %p101 = por %p99, %p100
      %p102 = scmp.ne.s32.totalorder %s94, %s96
      %p103 = scmp.eq.s32.totalorder %s28, 1
      %p104 = por %p102, %p103
      %p105 = scmp.ne.s32.totalorder %s96, %s97
      %p106 = scmp.eq.s32.totalorder %s28, 0
      %p107 = por %p105, %p106
      %p108 = scmp.ne.s32.totalorder %s96, %s97
      %p109 = scmp.eq.s32.totalorder %s29, 1
      %p110 = por %p108, %p109
      %p112 = scmp.ne.s32.totalorder %s97, %s111
      %p113 = scmp.eq.s32.totalorder %s29, 0
      %p114 = por %p112, %p113
      %s116 = sadd.s32 %s115, 1
      %p119 = scmp.eq.s32.totalorder %s23, 1
      %p120 = scmp.ne.s32.totalorder %s115, %s117
      %p121 = scmp.eq.s32.totalorder %s23, 0
      %p122 = por %p120, %p121
      %p123 = scmp.ne.s32.totalorder %s115, %s117
      %p124 = scmp.eq.s32.totalorder %s28, 1
      %p125 = por %p123, %p124
      %p126 = scmp.ne.s32.totalorder %s117, %s118
      %p127 = scmp.eq.s32.totalorder %s28, 0
      %p128 = por %p126, %p127
      %p129 = scmp.ne.s32.totalorder %s117, %s118
      %p130 = scmp.eq.s32.totalorder %s29, 1
      %p131 = por %p129, %p130
      %p133 = scmp.ne.s32.totalorder %s118, %s132
      %p134 = scmp.eq.s32.totalorder %s29, 0
      %p135 = por %p133, %p134
      %s137 = sadd.s32 %s136, 1
      %p140 = scmp.eq.s32.totalorder %s23, 1
      %p141 = scmp.ne.s32.totalorder %s136, %s138
      %p142 = scmp.eq.s32.totalorder %s23, 0
      %p143 = por %p141, %p142
      %p144 = scmp.ne.s32.totalorder %s136, %s138
      %p145 = scmp.eq.s32.totalorder %s28, 1
      %p146 = por %p144, %p145
      %p147 = scmp.ne.s32.totalorder %s138, %s139
      %p148 = scmp.eq.s32.totalorder %s28, 0
      %p149 = por %p147, %p148
      %p150 = scmp.ne.s32.totalorder %s138, %s139
      %p151 = scmp.eq.s32.totalorder %s29, 1
      %p152 = por %p150, %p151
      %p154 = scmp.ne.s32.totalorder %s139, %s153
      %p155 = scmp.eq.s32.totalorder %s29, 0
      %p156 = por %p154, %p155
      %s157 = smul.u32 %s31, %s30
      %s158 = smul.u32 %s38, %s42
      %s159 = ssub.s32 %s157, %s158
      %p160 = scmp.eq.s32.totalorder %s159, 0
      %s162 = sadd.s32 %s161, 1
      %s163 = scalar_select %p160, %s161, %s162
      %p166 = pneg %p160
      %p167 = scmp.eq.s32.totalorder %s23, 1
      %p168 = por %p166, %p167
      %p169 = scmp.ne.s32.totalorder %s161, %s164
      %p170 = scmp.eq.s32.totalorder %s23, 0
      %p171 = por %p169, %p170
      %p172 = scmp.ne.s32.totalorder %s161, %s164
      %p173 = scmp.eq.s32.totalorder %s28, 1
      %p174 = por %p172, %p173
      %p175 = scmp.ne.s32.totalorder %s164, %s165
      %p176 = scmp.eq.s32.totalorder %s28, 0
      %p177 = por %p175, %p176
      %p178 = scmp.ne.s32.totalorder %s164, %s165
      %p179 = scmp.eq.s32.totalorder %s29, 1
      %p180 = por %p178, %p179
      %p182 = scmp.ne.s32.totalorder %s165, %s181
      %p183 = scmp.eq.s32.totalorder %s29, 0
      %p184 = por %p182, %p183
      %s186 = sadd.s32 %s185, 1
      %p189 = scmp.eq.s32.totalorder %s23, 1
      %p190 = scmp.ne.s32.totalorder %s185, %s187
      %p191 = scmp.eq.s32.totalorder %s23, 0
      %p192 = por %p190, %p191
      %p193 = scmp.ne.s32.totalorder %s185, %s187
      %p194 = scmp.eq.s32.totalorder %s28, 1
      %p195 = por %p193, %p194
      %p196 = scmp.ne.s32.totalorder %s187, %s188
      %p197 = scmp.eq.s32.totalorder %s28, 0
      %p198 = por %p196, %p197
      %p199 = scmp.ne.s32.totalorder %s187, %s188
      %p200 = scmp.eq.s32.totalorder %s29, 1
      %p201 = por %p199, %p200
      %p203 = scmp.ne.s32.totalorder %s188, %s202
      %p204 = scmp.eq.s32.totalorder %s29, 0
      %p205 = por %p203, %p204
      %p206 = scmp.le.s32.totalorder 1, %s23
      %p207 = scmp.lt.s32.totalorder %s23, 3
      %p208 = pnand %p206, %p207
      %p209 = pneg %p208
      // Predicated region
      $region9: #{tpu_custom_call.1} parent=5 // pred_check
        _
      $region10: #{tpu_custom_call.1} parent=5 // pred_check_branch
        %211 = sbr.rel (%p208) target = $region12
      $region11: #{tpu_custom_call.1} parent=5 // pred_region
        %s212 = ssub.s32 %s23, 1
        // Predicated region
        $region13: #{tpu_custom_call.1} parent=11 // pred_check
          %p213 = pneg %p86
        $region14: #{tpu_custom_call.1} parent=11 // pred_check_branch
          %215 = sbr.rel (%p213) target = $region16
        $region15: #{tpu_custom_call.1} parent=11 // pred_region
          %217 = vsyncadd [#allocation11], 0
          %s218 = sshll.u32 %s1, 4
          %s219 = int_to_ptr.hbm [resolvable:$true] %s218
          %s220 = sshll.u32 [#allocation10], 4
          %s221 = int_to_ptr.vmem [resolvable:$true] %s220
          %226 = dma.hbm_to_vmem [thread:$0]  %s219, 2048, %s221, [#allocation11], 128, 128, 8
        $region16: #{tpu_custom_call.1} parent=11 // pred_fallthru
          _
        // Predicated region
        $region17: #{tpu_custom_call.1} parent=11 // pred_check
          %p227 = pneg %p107
        $region18: #{tpu_custom_call.1} parent=11 // pred_check_branch
          %229 = sbr.rel (%p227) target = $region20
        $region19: #{tpu_custom_call.1} parent=11 // pred_region
          _
        $region20: #{tpu_custom_call.1} parent=11 // pred_fallthru
          _
        // Predicated region
        $region21: #{tpu_custom_call.1} parent=11 // pred_check
          %p230 = pneg %p128
        $region22: #{tpu_custom_call.1} parent=11 // pred_check_branch
          %232 = sbr.rel (%p230) target = $region24
        $region23: #{tpu_custom_call.1} parent=11 // pred_region
          _
        $region24: #{tpu_custom_call.1} parent=11 // pred_fallthru
          _
        // Predicated region
        $region25: #{tpu_custom_call.1} parent=11 // pred_check
          %p233 = pneg %p149
        $region26: #{tpu_custom_call.1} parent=11 // pred_check_branch
          %235 = sbr.rel (%p233) target = $region28
        $region27: #{tpu_custom_call.1} parent=11 // pred_region
          _
        $region28: #{tpu_custom_call.1} parent=11 // pred_fallthru
          _
      $region12: #{tpu_custom_call.1} parent=5 // pred_fallthru
        _
      %p236 = scmp.lt.s32.totalorder %s23, 2
      // Predicated region
      $region29: #{tpu_custom_call.1} parent=5 // pred_check
        %p237 = pneg %p236
      $region30: #{tpu_custom_call.1} parent=5 // pred_check_branch
        %239 = sbr.rel (%p237) target = $region32
      $region31: #{tpu_custom_call.1} parent=5 // pred_region
        // Predicated region
        $region33: #{tpu_custom_call.1} parent=31 // pred_check
          %p240 = pneg %p59
        $region34: #{tpu_custom_call.1} parent=31 // pred_check_branch
          %242 = sbr.rel (%p240) target = $region36
        $region35: #{tpu_custom_call.1} parent=31 // pred_region
          %s243 = sand.u32 %s49, 1
          %s244 = scalar_lea.sflag [#allocation8], %s243
          %s245 = sand.u32 %s49, 1
          %s246 = smul.addr %s245, 64
          %s247 = scalar_lea.vmem [#allocation7], %s246
          %s248 = ssub.s32 1, %s30
          %s249 = smul.u32 %s31, %s248
          %s250 = smul.u32 16, %s249
          %252 = vsyncadd %s244, 0
          %s253 = smul.addr %s250, 4
          %s254 = scalar_lea.hbm %s0, %s253
          %s255 = sshll.u32 %s254, 4
          %s256 = int_to_ptr.hbm [resolvable:$true] %s255
          %s257 = sshll.u32 %s247, 4
          %s258 = int_to_ptr.vmem [resolvable:$true] %s257
          %263 = dma.hbm_to_vmem [thread:$0]  %s256, 1024, %s258, %s244, 64, 64, 4
        $region36: #{tpu_custom_call.1} parent=31 // pred_fallthru
          _
      $region32: #{tpu_custom_call.1} parent=5 // pred_fallthru
        _
      %p264 = scmp.le.s32.totalorder 1, %s23
      %p265 = scmp.lt.s32.totalorder %s23, 3
      %p266 = pnand %p264, %p265
      %p267 = pneg %p266
      // Predicated region
      $region37: #{tpu_custom_call.1} parent=5 // pred_check
        _
      $region38: #{tpu_custom_call.1} parent=5 // pred_check_branch
        %269 = sbr.rel (%p266) target = $region40
      $region39: #{tpu_custom_call.1} parent=5 // pred_region
        %s270 = ssub.s32 %s23, 1
        %s271 = sand.u32 %s52, 1
        %s272 = scalar_lea.sflag [#allocation8], %s271
        %s273 = sand.u32 %s52, 1
        %s274 = smul.addr %s273, 64
        %s275 = scalar_lea.vmem [#allocation7], %s274
        // Predicated region
        $region41: #{tpu_custom_call.1} parent=39 // pred_check
          %p276 = pneg %p65
        $region42: #{tpu_custom_call.1} parent=39 // pred_check_branch
          %278 = sbr.rel (%p276) target = $region44
        $region43: #{tpu_custom_call.1} parent=39 // pred_region
          %280 = dma.done %s272, 1024
        $region44: #{tpu_custom_call.1} parent=39 // pred_fallthru
          _
        // Predicated region
        $region45: #{tpu_custom_call.1} parent=39 // pred_check
          %p281 = pneg %p86
        $region46: #{tpu_custom_call.1} parent=39 // pred_check_branch
          %283 = sbr.rel (%p281) target = $region48
        $region47: #{tpu_custom_call.1} parent=39 // pred_region
          %285 = dma.done [#allocation11], 2048
        $region48: #{tpu_custom_call.1} parent=39 // pred_fallthru
          _
        %s286 = sand.u32 %s52, 1
        %s287 = scalar_lea.sflag [#allocation8], %s286
        %s288 = sand.u32 %s52, 1
        %s289 = smul.addr %s288, 64
        %s290 = scalar_lea.vmem [#allocation7], %s289
        %p291 = pneg %p65
        %p292 = pneg %p62
        %p293 = pneg %p86
        %p294 = pneg %p83
        %p295 = pneg %p107
        %p296 = pneg %p104
        %p297 = pneg %p128
        %p298 = pneg %p125
        %p299 = pneg %p149
        %p300 = pneg %p146
        %p301 = pneg %p177
        %p302 = pneg %p174
        %s303 = sand.u32 %s164, 1
        %s304 = scalar_lea.sflag [#allocation9], %s303
        %s305 = sand.u32 %s164, 1
        %s306 = scalar_lea.vmem [#allocation12], %s305
        %p307 = pneg %p198
        %p308 = pneg %p195
        %s309 = ssub.s32 1, %s32
        %s310 = smul.u32 %s33, %s309
        %s311 = smul.u32 16, %s310
        %s312 = smul.u32 %s33, %s32
        %p313 = scmp.eq.s32.totalorder %s32, 0
        %p314 = scmp.eq.s32.totalorder %s33, 0
        %p315 = pnand %p313, %p314
        %p316 = pneg %p315
        // Predicated region
        $region49: #{tpu_custom_call.1} parent=39 // pred_check
          _
        $region50: #{tpu_custom_call.1} parent=39 // pred_check_branch
          %318 = sbr.rel (%p315) target = $region52
        $region51: #{tpu_custom_call.1} parent=39 // pred_region
          %vm319 = vcmask 0
          %320 = vst.msk [vmem:[#allocation2] sm:$0x1] %vm319, -inf
          %321 = vst.msk [vmem:[#allocation3] sm:$0x1] %vm319, 0.0
          %322 = vst [vmem:[#allocation4] sm:$0x1] 0.0
        $region52: #{tpu_custom_call.1} parent=39 // pred_fallthru
          _
        // Predicated region
        $region53: #{tpu_custom_call.1} parent=39 // pred_check
          %p323 = pneg %p313
        $region54: #{tpu_custom_call.1} parent=39 // pred_check_branch
          %325 = sbr.rel (%p323) target = $region56
        $region55: #{tpu_custom_call.1} parent=39 // pred_region
          %v326 = vld [vmem:[%s275] sm:$0xf]
          %v327 = vld [vmem:[%s275 + $0x4] sm:$0xf]
          %v328 = vld [vmem:[%s275 + $0x8] sm:$0xf]
          %v329 = vld [vmem:[%s275 + $0xc] sm:$0xf]
          %v330 = vld [vmem:[%s275 + $0x10] sm:$0xf]
          %v331 = vld [vmem:[%s275 + $0x14] sm:$0xf]
          %v332 = vld [vmem:[%s275 + $0x18] sm:$0xf]
          %v333 = vld [vmem:[%s275 + $0x1c] sm:$0xf]
          %v334 = vld [vmem:[%s275 + $0x20] sm:$0xf]
          %v335 = vld [vmem:[%s275 + $0x24] sm:$0xf]
          %v336 = vld [vmem:[%s275 + $0x28] sm:$0xf]
          %v337 = vld [vmem:[%s275 + $0x2c] sm:$0xf]
          %v338 = vld [vmem:[%s275 + $0x30] sm:$0xf]
          %v339 = vld [vmem:[%s275 + $0x34] sm:$0xf]
          %v340 = vld [vmem:[%s275 + $0x38] sm:$0xf]
          %v341 = vld [vmem:[%s275 + $0x3c] sm:$0xf]
          %v342 = vld [vmem:[#allocation10] sm:$0xff]
          %v343 = vld [vmem:[#allocation10 + $0x8] sm:$0xff]
          %v344 = vld [vmem:[#allocation10 + $0x10] sm:$0xff]
          %v345 = vld [vmem:[#allocation10 + $0x18] sm:$0xff]
          %v346 = vld [vmem:[#allocation10 + $0x20] sm:$0xff]
          %v347 = vld [vmem:[#allocation10 + $0x28] sm:$0xff]
          %v348 = vld [vmem:[#allocation10 + $0x30] sm:$0xff]
          %v349 = vld [vmem:[#allocation10 + $0x38] sm:$0xff]
          %v350 = vld [vmem:[#allocation10 + $0x40] sm:$0xff]
          %v351 = vld [vmem:[#allocation10 + $0x48] sm:$0xff]
          %v352 = vld [vmem:[#allocation10 + $0x50] sm:$0xff]
          %v353 = vld [vmem:[#allocation10 + $0x58] sm:$0xff]
          %v354 = vld [vmem:[#allocation10 + $0x60] sm:$0xff]
          %v355 = vld [vmem:[#allocation10 + $0x68] sm:$0xff]
          %v356 = vld [vmem:[#allocation10 + $0x70] sm:$0xff]
          %v357 = vld [vmem:[#allocation10 + $0x78] sm:$0xff]
          %v358 = vld [vmem:[%s2] sm:$0x3]
          %v360 = vperm.slane %v358, 0
          %v361 = vperm.slane %v358, 1
          %v380 = vunpack.c.l.b16 %v326
          %v381 = vunpack.c.l.b16 %v327
          %v382 = vunpack.c.l.b16 %v328
          %v383 = vunpack.c.l.b16 %v329
          %v384 = vunpack.c.l.b16 %v330
          %v385 = vunpack.c.l.b16 %v331
          %v386 = vunpack.c.l.b16 %v332
          %v387 = vunpack.c.l.b16 %v333
          %v388 = vunpack.c.l.b16 %v334
          %v389 = vunpack.c.l.b16 %v335
          %v390 = vunpack.c.l.b16 %v336
          %v391 = vunpack.c.l.b16 %v337
          %v392 = vunpack.c.l.b16 %v338
          %v393 = vunpack.c.l.b16 %v339
          %v394 = vunpack.c.l.b16 %v340
          %v395 = vunpack.c.l.b16 %v341
          %v396 = vpack.c.b16 %v381, %v380
          %v397 = vpack.c.b16 %v383, %v382
          %v398 = vpack.c.b16 %v385, %v384
          %v399 = vpack.c.b16 %v387, %v386
          %v400 = vpack.c.b16 %v389, %v388
          %v401 = vpack.c.b16 %v391, %v390
          %v402 = vpack.c.b16 %v393, %v392
          %v403 = vpack.c.b16 %v395, %v394
          %v428 = vunpack.c.l.b16 %v342
          %v429 = vunpack.c.h.b16 %v342
          %v430 = vunpack.c.l.b16 %v343
          %v431 = vunpack.c.h.b16 %v343
          %v432 = vunpack.c.l.b16 %v344
          %v433 = vunpack.c.h.b16 %v344
          %v434 = vunpack.c.l.b16 %v345
          %v435 = vunpack.c.h.b16 %v345
          %v436 = vunpack.c.l.b16 %v346
          %v437 = vunpack.c.h.b16 %v346
          %v438 = vunpack.c.l.b16 %v347
          %v439 = vunpack.c.h.b16 %v347
          %v440 = vunpack.c.l.b16 %v348
          %v441 = vunpack.c.h.b16 %v348
          %v442 = vunpack.c.l.b16 %v349
          %v443 = vunpack.c.h.b16 %v349
          %v444 = vunpack.c.l.b16 %v350
          %v445 = vunpack.c.h.b16 %v350
          %v446 = vunpack.c.l.b16 %v351
          %v447 = vunpack.c.h.b16 %v351
          %v448 = vunpack.c.l.b16 %v352
          %v449 = vunpack.c.h.b16 %v352
          %v450 = vunpack.c.l.b16 %v353
          %v451 = vunpack.c.h.b16 %v353
          %v452 = vunpack.c.l.b16 %v354
          %v453 = vunpack.c.h.b16 %v354
          %v454 = vunpack.c.l.b16 %v355
          %v455 = vunpack.c.h.b16 %v355
          %v456 = vunpack.c.l.b16 %v356
          %v457 = vunpack.c.h.b16 %v356
          %v458 = vunpack.c.l.b16 %v357
          %v459 = vunpack.c.h.b16 %v357
          %v460 = vpack.c.b16 %v430, %v428
          %v461 = vpack.c.b16 %v431, %v429
          %v462 = vpack.c.b16 %v434, %v432
          %v463 = vpack.c.b16 %v435, %v433
          %v464 = vpack.c.b16 %v438, %v436
          %v465 = vpack.c.b16 %v439, %v437
          %v466 = vpack.c.b16 %v442, %v440
          %v467 = vpack.c.b16 %v443, %v441
          %v468 = vpack.c.b16 %v446, %v444
          %v469 = vpack.c.b16 %v447, %v445
          %v470 = vpack.c.b16 %v450, %v448
          %v471 = vpack.c.b16 %v451, %v449
          %v472 = vpack.c.b16 %v454, %v452
          %v473 = vpack.c.b16 %v455, %v453
          %v474 = vpack.c.b16 %v458, %v456
          %v475 = vpack.c.b16 %v459, %v457
          %492 = vmatpush.bf16.msra.mxu0 %v474
          %493 = vmatpush.bf16.msra.mxu0 %v472
          %494 = vmatpush.bf16.msra.mxu0 %v470
          %495 = vmatpush.bf16.msra.mxu0 %v468
          %496 = vmatpush.bf16.msra.mxu0 %v466
          %497 = vmatpush.bf16.msra.mxu0 %v464
          %498 = vmatpush.bf16.msra.mxu0 %v462
          %499 = vmatpush.bf16.msra.mxu0 %v460
          %500 = vmatmul.bf16.gmra.mxu0 %v396
          %v501 = vpop.f32.mrf.mxu0
          %v502 = vadd.f32 %v360, %v501
          %v503 = vpop.f32.mrf.mxu0
          %v504 = vadd.f32 %v360, %v503
          %505 = vmatmul.bf16.gmra.mxu0 %v397
          %v506 = vpop.f32.mrf.mxu0
          %v507 = vadd.f32 %v360, %v506
          %v508 = vpop.f32.mrf.mxu0
          %v509 = vadd.f32 %v360, %v508
          %510 = vmatmul.bf16.gmra.mxu0 %v398
          %v511 = vpop.f32.mrf.mxu0
          %v512 = vadd.f32 %v360, %v511
          %v513 = vpop.f32.mrf.mxu0
          %v514 = vadd.f32 %v360, %v513
          %515 = vmatmul.bf16.gmra.mxu0 %v399
          %v516 = vpop.f32.mrf.mxu0
          %v517 = vadd.f32 %v360, %v516
          %v518 = vpop.f32.mrf.mxu0
          %v519 = vadd.f32 %v360, %v518
          %520 = vmatmul.bf16.gmra.mxu0 %v400
          %v521 = vpop.f32.mrf.mxu0
          %v522 = vadd.f32 %v360, %v521
          %v523 = vpop.f32.mrf.mxu0
          %v524 = vadd.f32 %v360, %v523
          %525 = vmatmul.bf16.gmra.mxu0 %v401
          %v526 = vpop.f32.mrf.mxu0
          %v527 = vadd.f32 %v360, %v526
          %v528 = vpop.f32.mrf.mxu0
          %v529 = vadd.f32 %v360, %v528
          %530 = vmatmul.bf16.gmra.mxu0 %v402
          %v531 = vpop.f32.mrf.mxu0
          %v532 = vadd.f32 %v360, %v531
          %v533 = vpop.f32.mrf.mxu0
          %v534 = vadd.f32 %v360, %v533
          %535 = vmatmul.bf16.gmra.mxu0 %v403
          %v536 = vpop.f32.mrf.mxu0
          %v537 = vadd.f32 %v360, %v536
          %v538 = vpop.f32.mrf.mxu0
          %v539 = vadd.f32 %v360, %v538
          %540 = vdwg.mxu0
          %541 = vmatpush.bf16.msra.mxu0 %v475
          %542 = vmatpush.bf16.msra.mxu0 %v473
          %543 = vmatpush.bf16.msra.mxu0 %v471
          %544 = vmatpush.bf16.msra.mxu0 %v469
          %545 = vmatpush.bf16.msra.mxu0 %v467
          %546 = vmatpush.bf16.msra.mxu0 %v465
          %547 = vmatpush.bf16.msra.mxu0 %v463
          %548 = vmatpush.bf16.msra.mxu0 %v461
          %549 = vmatmul.bf16.gmra.mxu0 %v396
          %v550 = vpop.f32.mrf.mxu0
          %v551 = vadd.f32 %v361, %v550
          %v552 = vpop.f32.mrf.mxu0
          %v553 = vadd.f32 %v361, %v552
          %554 = vmatmul.bf16.gmra.mxu0 %v397
          %v555 = vpop.f32.mrf.mxu0
          %v556 = vadd.f32 %v361, %v555
          %v557 = vpop.f32.mrf.mxu0
          %v558 = vadd.f32 %v361, %v557
          %559 = vmatmul.bf16.gmra.mxu0 %v398
          %v560 = vpop.f32.mrf.mxu0
          %v561 = vadd.f32 %v361, %v560
          %v562 = vpop.f32.mrf.mxu0
          %v563 = vadd.f32 %v361, %v562
          %564 = vmatmul.bf16.gmra.mxu0 %v399
          %v565 = vpop.f32.mrf.mxu0
          %v566 = vadd.f32 %v361, %v565
          %v567 = vpop.f32.mrf.mxu0
          %v568 = vadd.f32 %v361, %v567
          %569 = vmatmul.bf16.gmra.mxu0 %v400
          %v570 = vpop.f32.mrf.mxu0
          %v571 = vadd.f32 %v361, %v570
          %v572 = vpop.f32.mrf.mxu0
          %v573 = vadd.f32 %v361, %v572
          %574 = vmatmul.bf16.gmra.mxu0 %v401
          %v575 = vpop.f32.mrf.mxu0
          %v576 = vadd.f32 %v361, %v575
          %v577 = vpop.f32.mrf.mxu0
          %v578 = vadd.f32 %v361, %v577
          %579 = vmatmul.bf16.gmra.mxu0 %v402
          %v580 = vpop.f32.mrf.mxu0
          %v581 = vadd.f32 %v361, %v580
          %v582 = vpop.f32.mrf.mxu0
          %v583 = vadd.f32 %v361, %v582
          %584 = vmatmul.bf16.gmra.mxu0 %v403
          %v585 = vpop.f32.mrf.mxu0
          %v586 = vadd.f32 %v361, %v585
          %v587 = vpop.f32.mrf.mxu0
          %v588 = vadd.f32 %v361, %v587
          %589 = vdwg.mxu0
          %v590 = vtanh.pop %v502
          %v591 = vtanh.pop %v504
          %v592 = vtanh.pop %v507
          %v593 = vtanh.pop %v509
          %v594 = vtanh.pop %v512
          %v595 = vtanh.pop %v514
          %v596 = vtanh.pop %v517
          %v597 = vtanh.pop %v519
          %v598 = vtanh.pop %v522
          %v599 = vtanh.pop %v524
          %v600 = vtanh.pop %v527
          %v601 = vtanh.pop %v529
          %v602 = vtanh.pop %v532
          %v603 = vtanh.pop %v534
          %v604 = vtanh.pop %v537
          %v605 = vtanh.pop %v539
          %v606 = vxor.u32 %v551, 2147483648
          %v607 = vxor.u32 %v553, 2147483648
          %v608 = vxor.u32 %v556, 2147483648
          %v609 = vxor.u32 %v558, 2147483648
          %v610 = vxor.u32 %v561, 2147483648
          %v611 = vxor.u32 %v563, 2147483648
          %v612 = vxor.u32 %v566, 2147483648
          %v613 = vxor.u32 %v568, 2147483648
          %v614 = vxor.u32 %v571, 2147483648
          %v615 = vxor.u32 %v573, 2147483648
          %v616 = vxor.u32 %v576, 2147483648
          %v617 = vxor.u32 %v578, 2147483648
          %v618 = vxor.u32 %v581, 2147483648
          %v619 = vxor.u32 %v583, 2147483648
          %v620 = vxor.u32 %v586, 2147483648
          %v621 = vxor.u32 %v588, 2147483648
          %v622 = vmul.f32 %v606, 1.442695
          %v623 = vpow.pop %v622
          %v624 = vmul.f32 %v607, 1.442695
          %v625 = vpow.pop %v624
          %v626 = vmul.f32 %v608, 1.442695
          %v627 = vpow.pop %v626
          %v628 = vmul.f32 %v609, 1.442695
          %v629 = vpow.pop %v628
          %v630 = vmul.f32 %v610, 1.442695
          %v631 = vpow.pop %v630
          %v632 = vmul.f32 %v611, 1.442695
          %v633 = vpow.pop %v632
          %v634 = vmul.f32 %v612, 1.442695
          %v635 = vpow.pop %v634
          %v636 = vmul.f32 %v613, 1.442695
          %v637 = vpow.pop %v636
          %v638 = vmul.f32 %v614, 1.442695
          %v639 = vpow.pop %v638
          %v640 = vmul.f32 %v615, 1.442695
          %v641 = vpow.pop %v640
          %v642 = vmul.f32 %v616, 1.442695
          %v643 = vpow.pop %v642
          %v644 = vmul.f32 %v617, 1.442695
          %v645 = vpow.pop %v644
          %v646 = vmul.f32 %v618, 1.442695
          %v647 = vpow.pop %v646
          %v648 = vmul.f32 %v619, 1.442695
          %v649 = vpow.pop %v648
          %v650 = vmul.f32 %v620, 1.442695
          %v651 = vpow.pop %v650
          %v652 = vmul.f32 %v621, 1.442695
          %v653 = vpow.pop %v652
          %v654 = vadd.f32 %v623, 1.0
          %v655 = vadd.f32 %v625, 1.0
          %v656 = vadd.f32 %v627, 1.0
          %v657 = vadd.f32 %v629, 1.0
          %v658 = vadd.f32 %v631, 1.0
          %v659 = vadd.f32 %v633, 1.0
          %v660 = vadd.f32 %v635, 1.0
          %v661 = vadd.f32 %v637, 1.0
          %v662 = vadd.f32 %v639, 1.0
          %v663 = vadd.f32 %v641, 1.0
          %v664 = vadd.f32 %v643, 1.0
          %v665 = vadd.f32 %v645, 1.0
          %v666 = vadd.f32 %v647, 1.0
          %v667 = vadd.f32 %v649, 1.0
          %v668 = vadd.f32 %v651, 1.0
          %v669 = vadd.f32 %v653, 1.0
          %v670 = vrcp.pop %v654
          %v671 = vmul.f32 %v654, %v670
          %v672 = vsub.f32 1.0, %v671
          %v673 = vmul.f32 %v670, %v672
          %v674 = vadd.f32 %v670, %v673
          %vm675 = vweird.f32 %v654
          %vm676 = vweird.f32 %v670
          %vm677 = vmor %vm675, %vm676
          %v678 = vsel %vm677, %v670, %v674
          %v679 = vand.u32 2147483647, %v654
          %vm680 = vcmp.eq.f32.partialorder %v679, 8.507059e+37
          %v681 = vand.u32 %v654, 2147483648
          %v682 = vor.u32 1.1754944e-38, %v681
          %v683 = vsel %vm680, %v682, %v678
          %v684 = vmul.f32 1.0, %v683
          %v685 = vrcp.pop %v655
          %v686 = vmul.f32 %v655, %v685
          %v687 = vsub.f32 1.0, %v686
          %v688 = vmul.f32 %v685, %v687
          %v689 = vadd.f32 %v685, %v688
          %vm690 = vweird.f32 %v655
          %vm691 = vweird.f32 %v685
          %vm692 = vmor %vm690, %vm691
          %v693 = vsel %vm692, %v685, %v689
          %v694 = vand.u32 2147483647, %v655
          %vm695 = vcmp.eq.f32.partialorder %v694, 8.507059e+37
          %v696 = vand.u32 %v655, 2147483648
          %v697 = vor.u32 1.1754944e-38, %v696
          %v698 = vsel %vm695, %v697, %v693
          %v699 = vmul.f32 1.0, %v698
          %v700 = vrcp.pop %v656
          %v701 = vmul.f32 %v656, %v700
          %v702 = vsub.f32 1.0, %v701
          %v703 = vmul.f32 %v700, %v702
          %v704 = vadd.f32 %v700, %v703
          %vm705 = vweird.f32 %v656
          %vm706 = vweird.f32 %v700
          %vm707 = vmor %vm705, %vm706
          %v708 = vsel %vm707, %v700, %v704
          %v709 = vand.u32 2147483647, %v656
          %vm710 = vcmp.eq.f32.partialorder %v709, 8.507059e+37
          %v711 = vand.u32 %v656, 2147483648
          %v712 = vor.u32 1.1754944e-38, %v711
          %v713 = vsel %vm710, %v712, %v708
          %v714 = vmul.f32 1.0, %v713
          %v715 = vrcp.pop %v657
          %v716 = vmul.f32 %v657, %v715
          %v717 = vsub.f32 1.0, %v716
          %v718 = vmul.f32 %v715, %v717
          %v719 = vadd.f32 %v715, %v718
          %vm720 = vweird.f32 %v657
          %vm721 = vweird.f32 %v715
          %vm722 = vmor %vm720, %vm721
          %v723 = vsel %vm722, %v715, %v719
          %v724 = vand.u32 2147483647, %v657
          %vm725 = vcmp.eq.f32.partialorder %v724, 8.507059e+37
          %v726 = vand.u32 %v657, 2147483648
          %v727 = vor.u32 1.1754944e-38, %v726
          %v728 = vsel %vm725, %v727, %v723
          %v729 = vmul.f32 1.0, %v728
          %v730 = vrcp.pop %v658
          %v731 = vmul.f32 %v658, %v730
          %v732 = vsub.f32 1.0, %v731
          %v733 = vmul.f32 %v730, %v732
          %v734 = vadd.f32 %v730, %v733
          %vm735 = vweird.f32 %v658
          %vm736 = vweird.f32 %v730
          %vm737 = vmor %vm735, %vm736
          %v738 = vsel %vm737, %v730, %v734
          %v739 = vand.u32 2147483647, %v658
          %vm740 = vcmp.eq.f32.partialorder %v739, 8.507059e+37
          %v741 = vand.u32 %v658, 2147483648
          %v742 = vor.u32 1.1754944e-38, %v741
          %v743 = vsel %vm740, %v742, %v738
          %v744 = vmul.f32 1.0, %v743
          %v745 = vrcp.pop %v659
          %v746 = vmul.f32 %v659, %v745
          %v747 = vsub.f32 1.0, %v746
          %v748 = vmul.f32 %v745, %v747
          %v749 = vadd.f32 %v745, %v748
          %vm750 = vweird.f32 %v659
          %vm751 = vweird.f32 %v745
          %vm752 = vmor %vm750, %vm751
          %v753 = vsel %vm752, %v745, %v749
          %v754 = vand.u32 2147483647, %v659
          %vm755 = vcmp.eq.f32.partialorder %v754, 8.507059e+37
          %v756 = vand.u32 %v659, 2147483648
          %v757 = vor.u32 1.1754944e-38, %v756
          %v758 = vsel %vm755, %v757, %v753
          %v759 = vmul.f32 1.0, %v758
          %v760 = vrcp.pop %v660
          %v761 = vmul.f32 %v660, %v760
          %v762 = vsub.f32 1.0, %v761
          %v763 = vmul.f32 %v760, %v762
          %v764 = vadd.f32 %v760, %v763
          %vm765 = vweird.f32 %v660
          %vm766 = vweird.f32 %v760
          %vm767 = vmor %vm765, %vm766
          %v768 = vsel %vm767, %v760, %v764
          %v769 = vand.u32 2147483647, %v660
          %vm770 = vcmp.eq.f32.partialorder %v769, 8.507059e+37
          %v771 = vand.u32 %v660, 2147483648
          %v772 = vor.u32 1.1754944e-38, %v771
          %v773 = vsel %vm770, %v772, %v768
          %v774 = vmul.f32 1.0, %v773
          %v775 = vrcp.pop %v661
          %v776 = vmul.f32 %v661, %v775
          %v777 = vsub.f32 1.0, %v776
          %v778 = vmul.f32 %v775, %v777
          %v779 = vadd.f32 %v775, %v778
          %vm780 = vweird.f32 %v661
          %vm781 = vweird.f32 %v775
          %vm782 = vmor %vm780, %vm781
          %v783 = vsel %vm782, %v775, %v779
          %v784 = vand.u32 2147483647, %v661
          %vm785 = vcmp.eq.f32.partialorder %v784, 8.507059e+37
          %v786 = vand.u32 %v661, 2147483648
          %v787 = vor.u32 1.1754944e-38, %v786
          %v788 = vsel %vm785, %v787, %v783
          %v789 = vmul.f32 1.0, %v788
          %v790 = vrcp.pop %v662
          %v791 = vmul.f32 %v662, %v790
          %v792 = vsub.f32 1.0, %v791
          %v793 = vmul.f32 %v790, %v792
          %v794 = vadd.f32 %v790, %v793
          %vm795 = vweird.f32 %v662
          %vm796 = vweird.f32 %v790
          %vm797 = vmor %vm795, %vm796
          %v798 = vsel %vm797, %v790, %v794
          %v799 = vand.u32 2147483647, %v662
          %vm800 = vcmp.eq.f32.partialorder %v799, 8.507059e+37
          %v801 = vand.u32 %v662, 2147483648
          %v802 = vor.u32 1.1754944e-38, %v801
          %v803 = vsel %vm800, %v802, %v798
          %v804 = vmul.f32 1.0, %v803
          %v805 = vrcp.pop %v663
          %v806 = vmul.f32 %v663, %v805
          %v807 = vsub.f32 1.0, %v806
          %v808 = vmul.f32 %v805, %v807
          %v809 = vadd.f32 %v805, %v808
          %vm810 = vweird.f32 %v663
          %vm811 = vweird.f32 %v805
          %vm812 = vmor %vm810, %vm811
          %v813 = vsel %vm812, %v805, %v809
          %v814 = vand.u32 2147483647, %v663
          %vm815 = vcmp.eq.f32.partialorder %v814, 8.507059e+37
          %v816 = vand.u32 %v663, 2147483648
          %v817 = vor.u32 1.1754944e-38, %v816
          %v818 = vsel %vm815, %v817, %v813
          %v819 = vmul.f32 1.0, %v818
          %v820 = vrcp.pop %v664
          %v821 = vmul.f32 %v664, %v820
          %v822 = vsub.f32 1.0, %v821
          %v823 = vmul.f32 %v820, %v822
          %v824 = vadd.f32 %v820, %v823
          %vm825 = vweird.f32 %v664
          %vm826 = vweird.f32 %v820
          %vm827 = vmor %vm825, %vm826
          %v828 = vsel %vm827, %v820, %v824
          %v829 = vand.u32 2147483647, %v664
          %vm830 = vcmp.eq.f32.partialorder %v829, 8.507059e+37
          %v831 = vand.u32 %v664, 2147483648
          %v832 = vor.u32 1.1754944e-38, %v831
          %v833 = vsel %vm830, %v832, %v828
          %v834 = vmul.f32 1.0, %v833
          %v835 = vrcp.pop %v665
          %v836 = vmul.f32 %v665, %v835
          %v837 = vsub.f32 1.0, %v836
          %v838 = vmul.f32 %v835, %v837
          %v839 = vadd.f32 %v835, %v838
          %vm840 = vweird.f32 %v665
          %vm841 = vweird.f32 %v835
          %vm842 = vmor %vm840, %vm841
          %v843 = vsel %vm842, %v835, %v839
          %v844 = vand.u32 2147483647, %v665
          %vm845 = vcmp.eq.f32.partialorder %v844, 8.507059e+37
          %v846 = vand.u32 %v665, 2147483648
          %v847 = vor.u32 1.1754944e-38, %v846
          %v848 = vsel %vm845, %v847, %v843
          %v849 = vmul.f32 1.0, %v848
          %v850 = vrcp.pop %v666
          %v851 = vmul.f32 %v666, %v850
          %v852 = vsub.f32 1.0, %v851
          %v853 = vmul.f32 %v850, %v852
          %v854 = vadd.f32 %v850, %v853
          %vm855 = vweird.f32 %v666
          %vm856 = vweird.f32 %v850
          %vm857 = vmor %vm855, %vm856
          %v858 = vsel %vm857, %v850, %v854
          %v859 = vand.u32 2147483647, %v666
          %vm860 = vcmp.eq.f32.partialorder %v859, 8.507059e+37
          %v861 = vand.u32 %v666, 2147483648
          %v862 = vor.u32 1.1754944e-38, %v861
          %v863 = vsel %vm860, %v862, %v858
          %v864 = vmul.f32 1.0, %v863
          %v865 = vrcp.pop %v667
          %v866 = vmul.f32 %v667, %v865
          %v867 = vsub.f32 1.0, %v866
          %v868 = vmul.f32 %v865, %v867
          %v869 = vadd.f32 %v865, %v868
          %vm870 = vweird.f32 %v667
          %vm871 = vweird.f32 %v865
          %vm872 = vmor %vm870, %vm871
          %v873 = vsel %vm872, %v865, %v869
          %v874 = vand.u32 2147483647, %v667
          %vm875 = vcmp.eq.f32.partialorder %v874, 8.507059e+37
          %v876 = vand.u32 %v667, 2147483648
          %v877 = vor.u32 1.1754944e-38, %v876
          %v878 = vsel %vm875, %v877, %v873
          %v879 = vmul.f32 1.0, %v878
          %v880 = vrcp.pop %v668
          %v881 = vmul.f32 %v668, %v880
          %v882 = vsub.f32 1.0, %v881
          %v883 = vmul.f32 %v880, %v882
          %v884 = vadd.f32 %v880, %v883
          %vm885 = vweird.f32 %v668
          %vm886 = vweird.f32 %v880
          %vm887 = vmor %vm885, %vm886
          %v888 = vsel %vm887, %v880, %v884
          %v889 = vand.u32 2147483647, %v668
          %vm890 = vcmp.eq.f32.partialorder %v889, 8.507059e+37
          %v891 = vand.u32 %v668, 2147483648
          %v892 = vor.u32 1.1754944e-38, %v891
          %v893 = vsel %vm890, %v892, %v888
          %v894 = vmul.f32 1.0, %v893
          %v895 = vrcp.pop %v669
          %v896 = vmul.f32 %v669, %v895
          %v897 = vsub.f32 1.0, %v896
          %v898 = vmul.f32 %v895, %v897
          %v899 = vadd.f32 %v895, %v898
          %vm900 = vweird.f32 %v669
          %vm901 = vweird.f32 %v895
          %vm902 = vmor %vm900, %vm901
          %v903 = vsel %vm902, %v895, %v899
          %v904 = vand.u32 2147483647, %v669
          %vm905 = vcmp.eq.f32.partialorder %v904, 8.507059e+37
          %v906 = vand.u32 %v669, 2147483648
          %v907 = vor.u32 1.1754944e-38, %v906
          %v908 = vsel %vm905, %v907, %v903
          %v909 = vmul.f32 1.0, %v908
          %v910 = vmul.f32 %v590, %v684
          %v911 = vmul.f32 %v591, %v699
          %v912 = vmul.f32 %v592, %v714
          %v913 = vmul.f32 %v593, %v729
          %v914 = vmul.f32 %v594, %v744
          %v915 = vmul.f32 %v595, %v759
          %v916 = vmul.f32 %v596, %v774
          %v917 = vmul.f32 %v597, %v789
          %v918 = vmul.f32 %v598, %v804
          %v919 = vmul.f32 %v599, %v819
          %v920 = vmul.f32 %v600, %v834
          %v921 = vmul.f32 %v601, %v849
          %v922 = vmul.f32 %v602, %v864
          %v923 = vmul.f32 %v603, %v879
          %v924 = vmul.f32 %v604, %v894
          %v925 = vmul.f32 %v605, %v909
          %v926 = vld [vmem:[%s3] sm:$0x1]
          %v927 = vld [vmem:[#allocation6] sm:$0x1]
          %929 = vset.pattern.permute.xlu0 0
          %930 = vperm.xlu0 %929, %v927
          %v931 = vpop.permute.xlu0 %930
          %v933 = vperm.slane %v931, 0
          %934 = vmatpush.xpose.msra.mxu0 %v925
          %935 = vmatpush.xpose.msra.mxu0 %v924
          %936 = vmatpush.xpose.msra.mxu0 %v923
          %937 = vmatpush.xpose.msra.mxu0 %v922
          %938 = vmatpush.xpose.msra.mxu0 %v921
          %939 = vmatpush.xpose.msra.mxu0 %v920
          %940 = vmatpush.xpose.msra.mxu0 %v919
          %941 = vmatpush.xpose.msra.mxu0 %v918
          %942 = vmatpush.xpose.msra.mxu0 %v917
          %943 = vmatpush.xpose.msra.mxu0 %v916
          %944 = vmatpush.xpose.msra.mxu0 %v915
          %945 = vmatpush.xpose.msra.mxu0 %v914
          %946 = vmatpush.xpose.msra.mxu0 %v913
          %947 = vmatpush.xpose.msra.mxu0 %v912
          %948 = vmatpush.xpose.msra.mxu0 %v911
          %949 = vmatpush.xpose.msra.mxu0 %v910
          %950 = vmatmul.f32.gmra.mxu0 %v926
          %v951 = vpop.f32.mrf.mxu0
          %v952 = vadd.f32 %v933, %v951
          %953 = vdwg.mxu0
          %v954 = vlaneseq
          %v955 = vand.u32 %v954, 127
          %s956 = smul.u32 %s33, 128
          %v957 = vstv %s956
          %v958 = vadd.s32 %v955, %v957
          %vm959 = vcmp.lt.s32.totalorder %v958, 8
          %v960 = vsel %vm959, %v952, -inf
          %s961 = scalar_lea.vmem [#allocation5], %s33
          %962 = vst [vmem:[%s961] sm:$0x1] %v960
          %v963 = vld [vmem:[#allocation2] sm:$0x1]
          %vm964 = vcmask 1040384
          %v965 = vsel %vm964, %v960, -inf
          %966 = vmax.xlane.f32.xlu0 %v965
          %v967 = vpop.xlane.xlu0 %966
          %v968 = vmax.f32 %v963, %v967
          %v969 = vsub.f32 %v963, %v968
          %v970 = vmul.f32 %v969, 1.442695
          %v971 = vpow.pop %v970
          %973 = vset.pattern.permute.xlu0 0
          %974 = vperm.xlu0 %973, %v968
          %v975 = vpop.permute.xlu0 %974
          %v977 = vperm.slane %v975, 0
          %v978 = vsub.f32 %v960, %v977
          %v979 = vmul.f32 %v978, 1.442695
          %v980 = vpow.pop %v979
          %v981 = vld [vmem:[#allocation3] sm:$0x1]
          %v982 = vmul.f32 %v971, %v981
          %v983 = vsel %vm964, %v980, 0.0
          %984 = vadd.xlane.f32.xlu0 %v983
          %v985 = vpop.xlane.xlu0 %984
          %v986 = vadd.f32 %v982, %v985
          %vm987 = vcmask 0
          %988 = vst.msk [vmem:[#allocation3] sm:$0x1] %vm987, %v986
          %v989 = vld [vmem:[#allocation4] sm:$0x1]
          %991 = vset.pattern.permute.xlu0 0
          %992 = vperm.xlu0 %991, %v971
          %v993 = vpop.permute.xlu0 %992
          %v995 = vperm.slane %v993, 0
          %v996 = vmul.f32 %v995, %v989
          %v997 = vunpack.c.l.bf16 %v326
          %v998 = vunpack.c.l.bf16 %v327
          %v999 = vunpack.c.l.bf16 %v328
          %v1000 = vunpack.c.l.bf16 %v329
          %v1001 = vunpack.c.l.bf16 %v330
          %v1002 = vunpack.c.l.bf16 %v331
          %v1003 = vunpack.c.l.bf16 %v332
          %v1004 = vunpack.c.l.bf16 %v333
          %v1005 = vunpack.c.l.bf16 %v334
          %v1006 = vunpack.c.l.bf16 %v335
          %v1007 = vunpack.c.l.bf16 %v336
          %v1008 = vunpack.c.l.bf16 %v337
          %v1009 = vunpack.c.l.bf16 %v338
          %v1010 = vunpack.c.l.bf16 %v339
          %v1011 = vunpack.c.l.bf16 %v340
          %v1012 = vunpack.c.l.bf16 %v341
          %1013 = vmatpush.msra.mxu0 %v1012
          %1014 = vmatpush.msra.mxu0 %v1011
          %1015 = vmatpush.msra.mxu0 %v1010
          %1016 = vmatpush.msra.mxu0 %v1009
          %1017 = vmatpush.msra.mxu0 %v1008
          %1018 = vmatpush.msra.mxu0 %v1007
          %1019 = vmatpush.msra.mxu0 %v1006
          %1020 = vmatpush.msra.mxu0 %v1005
          %1021 = vmatpush.msra.mxu0 %v1004
          %1022 = vmatpush.msra.mxu0 %v1003
          %1023 = vmatpush.msra.mxu0 %v1002
          %1024 = vmatpush.msra.mxu0 %v1001
          %1025 = vmatpush.msra.mxu0 %v1000
          %1026 = vmatpush.msra.mxu0 %v999
          %1027 = vmatpush.msra.mxu0 %v998
          %1028 = vmatpush.msra.mxu0 %v997
          %1029 = vmatmul.f32.gmra.mxu0 %v980
          %v1030 = vpop.f32.mrf.mxu0
          %v1031 = vadd.f32 0.0, %v1030
          %1032 = vdwg.mxu0
          %v1033 = vadd.f32 %v996, %v1031
          %1034 = vst [vmem:[#allocation4] sm:$0x1] %v1033
          %1035 = vst.msk [vmem:[#allocation2] sm:$0x1] %vm987, %v968
        $region56: #{tpu_custom_call.1} parent=39 // pred_fallthru
          _
        %p1036 = scmp.eq.s32.totalorder %s32, 1
        // Predicated region
        $region57: #{tpu_custom_call.1} parent=39 // pred_check
          %p1037 = pneg %p1036
        $region58: #{tpu_custom_call.1} parent=39 // pred_check_branch
          %1039 = sbr.rel (%p1037) target = $region60
        $region59: #{tpu_custom_call.1} parent=39 // pred_region
          %v1040 = vld [vmem:[#allocation3] sm:$0x1]
          %v1041 = vrcp.pop %v1040
          %v1042 = vmul.f32 %v1040, %v1041
          %v1043 = vsub.f32 1.0, %v1042
          %v1044 = vmul.f32 %v1041, %v1043
          %v1045 = vadd.f32 %v1041, %v1044
          %vm1046 = vweird.f32 %v1040
          %vm1047 = vweird.f32 %v1041
          %vm1048 = vmor %vm1046, %vm1047
          %v1049 = vsel %vm1048, %v1041, %v1045
          %v1050 = vand.u32 2147483647, %v1040
          %vm1051 = vcmp.eq.f32.partialorder %v1050, 8.507059e+37
          %v1052 = vand.u32 %v1040, 2147483648
          %v1053 = vor.u32 1.1754944e-38, %v1052
          %v1054 = vsel %vm1051, %v1053, %v1049
          %s1055 = scalar_lea.vmem [#allocation5], %s33
          %v1056 = vld [vmem:[%s1055] sm:$0x1]
          %v1057 = vld [vmem:[#allocation2] sm:$0x1]
          %1059 = vset.pattern.permute.xlu0 0
          %1060 = vperm.xlu0 %1059, %v1057
          %v1061 = vpop.permute.xlu0 %1060
          %v1063 = vperm.slane %v1061, 0
          %v1064 = vsub.f32 %v1056, %v1063
          %v1065 = vmul.f32 %v1064, 1.442695
          %v1066 = vpow.pop %v1065
          %1068 = vset.pattern.permute.xlu0 0
          %1069 = vperm.xlu0 %1068, %v1054
          %v1070 = vpop.permute.xlu0 %1069
          %v1072 = vperm.slane %v1070, 0
          %v1073 = vmul.f32 %v1066, %v1072
          %1074 = vst [vmem:[%s306] sm:$0x1] %v1073
        $region60: #{tpu_custom_call.1} parent=39 // pred_fallthru
          _
        %p1075 = pnand %p1036, %p314
        %p1076 = pneg %p1075
        // Predicated region
        $region61: #{tpu_custom_call.1} parent=39 // pred_check
          _
        $region62: #{tpu_custom_call.1} parent=39 // pred_check_branch
          %1078 = sbr.rel (%p1075) target = $region64
        $region63: #{tpu_custom_call.1} parent=39 // pred_region
          %v1079 = vld [vmem:[#allocation3] sm:$0x1]
          %v1080 = vrcp.pop %v1079
          %v1081 = vmul.f32 %v1079, %v1080
          %v1082 = vsub.f32 1.0, %v1081
          %v1083 = vmul.f32 %v1080, %v1082
          %v1084 = vadd.f32 %v1080, %v1083
          %vm1085 = vweird.f32 %v1079
          %vm1086 = vweird.f32 %v1080
          %vm1087 = vmor %vm1085, %vm1086
          %v1088 = vsel %vm1087, %v1080, %v1084
          %v1089 = vand.u32 2147483647, %v1079
          %vm1090 = vcmp.eq.f32.partialorder %v1089, 8.507059e+37
          %v1091 = vand.u32 %v1079, 2147483648
          %v1092 = vor.u32 1.1754944e-38, %v1091
          %v1093 = vsel %vm1090, %v1092, %v1088
          %v1094 = vld [vmem:[#allocation4] sm:$0x1]
          %1096 = vset.pattern.permute.xlu0 0
          %1097 = vperm.xlu0 %1096, %v1093
          %v1098 = vpop.permute.xlu0 %1097
          %v1100 = vperm.slane %v1098, 0
          %v1101 = vmul.f32 %v1094, %v1100
          %1102 = vst [vmem:[#allocation13] sm:$0x1] %v1101
        $region64: #{tpu_custom_call.1} parent=39 // pred_fallthru
          _
        %s1103 = sand.u32 %s164, 1
        %s1104 = scalar_lea.sflag [#allocation9], %s1103
        %s1105 = sand.u32 %s164, 1
        %s1106 = scalar_lea.vmem [#allocation12], %s1105
        // Predicated region
        $region65: #{tpu_custom_call.1} parent=39 // pred_check
          %p1107 = pneg %p174
        $region66: #{tpu_custom_call.1} parent=39 // pred_check_branch
          %1109 = sbr.rel (%p1107) target = $region68
        $region67: #{tpu_custom_call.1} parent=39 // pred_region
          %s1110 = smul.u32 %s33, %s32
          %1112 = vsyncadd %s1104, 0
          %s1113 = scalar_lea.hbm %s5, %s1110
          %s1115 = sshll.u32 %s1106, 4
          %s1116 = int_to_ptr.vmem [resolvable:$true] %s1115
          %s1117 = sshll.u32 %s1113, 4
          %s1118 = int_to_ptr.hbm [resolvable:$true] %s1117
          %1120 = dma.vmem_to_hbm [thread:$0]  %s1116, 16, %s1118, %s1104
        $region68: #{tpu_custom_call.1} parent=39 // pred_fallthru
          _
        // Predicated region
        $region69: #{tpu_custom_call.1} parent=39 // pred_check
          %p1121 = pneg %p195
        $region70: #{tpu_custom_call.1} parent=39 // pred_check_branch
          %1123 = sbr.rel (%p1121) target = $region72
        $region71: #{tpu_custom_call.1} parent=39 // pred_region
          %1125 = vsyncadd [#allocation14], 0
          %s1127 = sshll.u32 [#allocation13], 4
          %s1128 = int_to_ptr.vmem [resolvable:$true] %s1127
          %s1129 = sshll.u32 %s6, 4
          %s1130 = int_to_ptr.hbm [resolvable:$true] %s1129
          %1132 = dma.vmem_to_hbm [thread:$0]  %s1128, 16, %s1130, [#allocation14]
        $region72: #{tpu_custom_call.1} parent=39 // pred_fallthru
          _
        // Predicated region
        $region73: #{tpu_custom_call.1} parent=39 // pred_check
          %p1133 = pneg %p195
        $region74: #{tpu_custom_call.1} parent=39 // pred_check_branch
          %1135 = sbr.rel (%p1133) target = $region76
        $region75: #{tpu_custom_call.1} parent=39 // pred_region
          %1137 = dma.done [#allocation14], 16
        $region76: #{tpu_custom_call.1} parent=39 // pred_fallthru
          _
      $region40: #{tpu_custom_call.1} parent=5 // pred_fallthru
        _
      %p1138 = scmp.le.s32.totalorder 2, %s23
      // Predicated region
      $region77: #{tpu_custom_call.1} parent=5 // pred_check
        %p1139 = pneg %p1138
      $region78: #{tpu_custom_call.1} parent=5 // pred_check_branch
        %1141 = sbr.rel (%p1139) target = $region80
      $region79: #{tpu_custom_call.1} parent=5 // pred_region
        %s1142 = ssub.s32 %s23, 2
        // Predicated region
        $region81: #{tpu_custom_call.1} parent=79 // pred_check
          %p1143 = pneg %p180
        $region82: #{tpu_custom_call.1} parent=79 // pred_check_branch
          %1145 = sbr.rel (%p1143) target = $region84
        $region83: #{tpu_custom_call.1} parent=79 // pred_region
          %s1146 = sand.u32 %s165, 1
          %s1147 = scalar_lea.sflag [#allocation9], %s1146
          %s1148 = sand.u32 %s165, 1
          %s1149 = scalar_lea.vmem [#allocation12], %s1148
          %1151 = dma.done %s1147, 16
        $region84: #{tpu_custom_call.1} parent=79 // pred_fallthru
          _
      $region80: #{tpu_custom_call.1} parent=5 // pred_fallthru
        _
    $region6: #{tpu_custom_call.1} parent=1 // loop_footer
      %s27 = sadd.s32 1, %s23
    $region7: #{tpu_custom_call.1} parent=1 // loop_footer_branch
      %22 = sbr.rel target = $region3
    $region8: #{tpu_custom_call.1} parent=1 // loop_exit
      _
    %1152 = vsyncpa [#allocation8], 1
    %s1153 = scalar_lea.sflag [#allocation8], 1
    %1154 = vsyncpa %s1153, 1
    %1155 = vsyncpa [#allocation11], 1
    %1156 = vsyncpa [#allocation9], 1
    %s1157 = scalar_lea.sflag [#allocation9], 1
    %1158 = vsyncpa %s1157, 1
    %1159 = vsyncpa [#allocation14], 1

</llo_original>
